<compile_context>
chip_gen: v6e
topology: v6e:2x2x1
jax: 0.10.0
libtpu: 0.0.40
codegen_flags: <defaults>
</compile_context>

<pallas_src>
import jax
import jax.numpy as jnp
from jax.experimental import pallas as pl
from jax.experimental.pallas import tpu as pltpu

KH = KW = 3  # 3x3 conv


def base_layer_kernel(x_ref, w_ref, b_ref, o_ref):
    """Fused (im2col-matmul) conv + folded-BN bias + ReLU on one row tile.

    x_ref: (TM, Kp)   im2col rows (Kp = PACK*KH*KW*Cin), lane-dense slab
    w_ref: (Kp, Cp)   BN-scale-folded, pixel-pair block-diagonal weights
    b_ref: (1,  Cp)   folded conv-bias + BN shift (replicated per packed pixel)
    o_ref: (TM, Cp)   output rows, Cp = PACK*Cout (=128 when PACK=2: unmasked stores)
    """
    acc = jnp.dot(x_ref[...], w_ref[...], preferred_element_type=jnp.float32)
    o_ref[...] = jnp.maximum(acc + b_ref[...], 0.0).astype(o_ref.dtype)


def _pick_row_tile(m, cap=2048):
    """Largest row tile <= cap that divides m (multiple of 8), else full m."""
    if m <= cap:
        return m
    for t in (2048, 1024, 512, 256, 128, 64, 32, 16, 8):
        if t <= cap and m % t == 0:
            return t
    return m


def base_layer_forward(x_nchw, w_hwio, conv_bias, gamma, beta,
                       running_mean, running_var, eps=1e-5):
    """Conv2d(3x3, stride=1, pad=1) + BatchNorm2d (inference) + ReLU. NCHW in/out."""
    N, Cin, H, W = x_nchw.shape
    Cout = w_hwio.shape[-1]
    M = N * H * W
    K = KH * KW * Cin

    # ---- BN folding: scale into the weights, shift into the bias ----
    scale = gamma / jnp.sqrt(running_var + eps)                     # (Cout,)
    w_folded = (w_hwio * scale[None, None, None, :]).reshape(K, Cout)
    bias = (conv_bias - running_mean) * scale + beta                # (Cout,)

    # ---- im2col in the wrapper: one lane-dense (M, 27) patch matrix ----
    x_nhwc = jnp.transpose(x_nchw, (0, 2, 3, 1))                    # NCHW -> NHWC
    x_pad = jnp.pad(x_nhwc, ((0, 0), (1, 1), (1, 1), (0, 0)))       # pad=1
    patches = [x_pad[:, kh:kh + H, kw:kw + W, :]                    # (kh,kw,cin) order
               for kh in range(KH) for kw in range(KW)]             #  matches w reshape
    x_cols = jnp.concatenate(patches, axis=-1).reshape(M, K)

    # ---- pack 2 pixels per row so the output lane width hits 128 ----
    pack = 2 if (M % 2 == 0) else 1
    Kp, Cp, Mp = pack * K, pack * Cout, M // pack
    x_packed = x_cols.reshape(Mp, Kp).astype(jnp.float32)           # contiguous bitcast
    if pack == 2:
        w_packed = jnp.zeros((Kp, Cp), jnp.float32)
        w_packed = w_packed.at[:K, :Cout].set(w_folded)
        w_packed = w_packed.at[K:, Cout:].set(w_folded)
        bias_packed = jnp.concatenate([bias, bias]).reshape(1, Cp)
    else:
        w_packed = w_folded.astype(jnp.float32)
        bias_packed = bias.reshape(1, Cp)
    w_packed = w_packed.astype(jnp.float32)
    bias_packed = bias_packed.astype(jnp.float32)

    tm = _pick_row_tile(Mp)          # single block at these shapes -> grid=(1,)
    grid = (Mp // tm,)

    out_packed = pl.pallas_call(
        base_layer_kernel,
        out_shape=jax.ShapeDtypeStruct((Mp, Cp), jnp.float32),
        grid_spec=pltpu.PrefetchScalarGridSpec(
            num_scalar_prefetch=0,
            grid=grid,
            in_specs=[
                pl.BlockSpec((tm, Kp), lambda i: (i, 0)),
                pl.BlockSpec((Kp, Cp), lambda i: (0, 0)),
                pl.BlockSpec((1, Cp), lambda i: (0, 0)),
            ],
            out_specs=pl.BlockSpec((tm, Cp), lambda i: (i, 0)),
        ),
        compiler_params=pltpu.CompilerParams(
            dimension_semantics=("parallel",)),
    )(x_packed, w_packed, bias_packed)

    # (Mp, 128) -> (M, 64) is a contiguous row-major reshape; then back to NCHW.
    out_nhwc = out_packed.reshape(N, H, W, Cout)
    return jnp.transpose(out_nhwc, (0, 3, 1, 2))


def reference_forward(x_nchw, w_hwio, conv_bias, gamma, beta,
                      running_mean, running_var, eps=1e-5):
    """Pure-JAX reference (for correctness check)."""
    x_nhwc = jnp.transpose(x_nchw, (0, 2, 3, 1))
    y = jax.lax.conv_general_dilated(
        x_nhwc, w_hwio, window_strides=(1, 1), padding="SAME",
        dimension_numbers=("NHWC", "HWIO", "NHWC"))
    y = y + conv_bias
    scale = gamma / jnp.sqrt(running_var + eps)
    y = (y - running_mean) * scale + beta
    y = jnp.maximum(y, 0.0)
    return jnp.transpose(y, (0, 3, 1, 2))


if __name__ == "__main__":
    # Shapes implied by the module: NCHW (2, 3, 16, 16) -> (2, 64, 16, 16).
    N, Cin, H, W = 2, 3, 16, 16
    Cout = 64

    key = jax.random.PRNGKey(0)
    k_x, k_w, k_b, k_g, k_be = jax.random.split(key, 5)

    x = jax.random.normal(k_x, (N, Cin, H, W), dtype=jnp.float32)

    fan_in = Cin * KH * KW
    w_hwio = jax.random.normal(k_w, (KH, KW, Cin, Cout), jnp.float32) / jnp.sqrt(fan_in)
    conv_bias = 0.05 * jax.random.normal(k_b, (Cout,), jnp.float32)
    gamma = 1.0 + 0.1 * jax.random.normal(k_g, (Cout,), jnp.float32)
    beta = 0.1 * jax.random.normal(k_be, (Cout,), jnp.float32)
    running_mean = jnp.zeros((Cout,), jnp.float32)   # fresh BN defaults
    running_var = jnp.ones((Cout,), jnp.float32)

    out = base_layer_forward(x, w_hwio, conv_bias, gamma, beta,
                             running_mean, running_var)
    out = jax.block_until_ready(out)

    ref = reference_forward(x, w_hwio, conv_bias, gamma, beta,
                            running_mean, running_var)
    assert out.shape == (N, Cout, H, W)
    assert jnp.allclose(out, ref, rtol=1e-3, atol=1e-3), "mismatch vs reference"

    print("KERNEL_OK")
</pallas_src>

<mosaic_0001>
module attributes {stable_mosaic.version = 11 : i64} {
  func.func @base_layer_kernel(%arg0: i32, %arg1: memref<256x54xf32, #tpu.memory_space<vmem>>, %arg2: memref<54x128xf32, #tpu.memory_space<vmem>>, %arg3: memref<1x128xf32, #tpu.memory_space<vmem>>, %arg4: memref<256x128xf32, #tpu.memory_space<vmem>>) attributes {dimension_semantics = [#tpu.dimension_semantics<parallel>], iteration_bounds = array<i64: 1>, scalar_prefetch = 0 : i64, scratch_operands = 0 : i64, tpu.core_type = #tpu.core_type<tc>, window_params = [{transform_indices = @transform_0, window_bounds = array<i64: 256, 54>}, {pipeline_mode = #tpu.pipeline_mode<synchronous>, transform_indices = @transform_1, window_bounds = array<i64: 54, 128>}, {pipeline_mode = #tpu.pipeline_mode<synchronous>, transform_indices = @transform_2, window_bounds = array<i64: 1, 128>}, {transform_indices = @transform_3, window_bounds = array<i64: 256, 128>}]} {
    %c0 = arith.constant 0 : index
    %c0_0 = arith.constant 0 : index
    %0 = vector.load %arg1[%c0, %c0_0] : memref<256x54xf32, #tpu.memory_space<vmem>>, vector<256x54xf32>
    %c0_1 = arith.constant 0 : index
    %c0_2 = arith.constant 0 : index
    %1 = vector.load %arg2[%c0_1, %c0_2] : memref<54x128xf32, #tpu.memory_space<vmem>>, vector<54x128xf32>
    %cst = arith.constant dense<0.000000e+00> : vector<256x128xf32>
    %2 = tpu.matmul %0, %1, %cst {dimension_numbers = #tpu.dot_dimension_numbers<[1], [0], [0], [1], [0, 0, 1, 1], [], []>} : vector<256x54xf32>, vector<54x128xf32>, vector<256x128xf32> -> vector<256x128xf32>
    %c0_3 = arith.constant 0 : index
    %c0_4 = arith.constant 0 : index
    %3 = vector.load %arg3[%c0_3, %c0_4] : memref<1x128xf32, #tpu.memory_space<vmem>>, vector<1x128xf32>
    %4 = vector.broadcast %3 : vector<1x128xf32> to vector<256x128xf32>
    %5 = arith.addf %2, %4 : vector<256x128xf32>
    %cst_5 = arith.constant 0.000000e+00 : f32
    %6 = vector.broadcast %cst_5 : f32 to vector<256x128xf32>
    %7 = arith.maximumf %5, %6 : vector<256x128xf32>
    %c0_6 = arith.constant 0 : index
    %c0_7 = arith.constant 0 : index
    %8 = vector.load %arg4[%c0_6, %c0_7] : memref<256x128xf32, #tpu.memory_space<vmem>>, vector<256x128xf32>
    tpu.vector_store %arg4[%c0_6, %c0_7], %7 {strides = array<i32>} : memref<256x128xf32, #tpu.memory_space<vmem>>, vector<256x128xf32>,
    return
  }
  func.func @transform_0(%arg0: i32) -> (i32, i32) {
    %c0_i32 = arith.constant 0 : i32
    %c0_i32_0 = arith.constant 0 : i32
    return %arg0, %c0_i32 : i32, i32
  }
  func.func @transform_1(%arg0: i32) -> (i32, i32) {
    %c0_i32 = arith.constant 0 : i32
    %c0_i32_0 = arith.constant 0 : i32
    %c0_i32_1 = arith.constant 0 : i32
    return %c0_i32, %c0_i32_0 : i32, i32
  }
  func.func @transform_2(%arg0: i32) -> (i32, i32) {
    %c0_i32 = arith.constant 0 : i32
    %c0_i32_0 = arith.constant 0 : i32
    %c0_i32_1 = arith.constant 0 : i32
    return %c0_i32, %c0_i32_0 : i32, i32
  }
  func.func @transform_3(%arg0: i32) -> (i32, i32) {
    %c0_i32 = arith.constant 0 : i32
    %c0_i32_0 = arith.constant 0 : i32
    return %arg0, %c0_i32 : i32, i32
  }
}

</mosaic_0001>

<llo_original>
// kernel: tpu_custom_call.1
$region0: #{tpu_custom_call.1}
  #allocation0 [shape = 'u32[]', space=smem, size = 0x4, offset = 0x4, fixed_abs, tag = 'smem constant byte address 0x4 - core index']
  #allocation1 [shape = 'u32[144,128]{1,0:T(1,128)}', space=vmem, size = 0x12000, scoped, tag = 'internal scratch']
  %s0 = inlined_call_operand.vmem [shape: f32[256,54], index: 0, kind: input, shape index: {}]
  %s1 = inlined_call_operand.vmem [shape: f32[54,128], index: 1, kind: input, shape index: {}]
  %s2 = inlined_call_operand.vmem [shape: f32[1,128], index: 2, kind: input, shape index: {}]
  %s3 = inlined_call_operand.hbm [shape: f32[256,128], index: 3, kind: output, shape index: {}]
  %s4 = sld [smem:[#allocation0]]
  $region22: #{tpu_custom_call.1} parent=0
    _
  %s6 = ssub.s32 1, %s4
  %s7 = scalar_select 0, %s6, %s4
  $region1: #{tpu_custom_call.1} parent=0
    #allocation2 [shape = 'u8[131072]{0}', space=vmem, size = 0x20000, scoped, tag = 'output window, operand 0, single buffered']
    #allocation3 [shape = 's32[1]{0}', space=sflag, size = 0x4, scoped, tag = 'scoped memory for tpu_custom_call.1']
    %8 = vsyncpa [#allocation3], 0
    // Predicated region
    $region2: #{tpu_custom_call.1} parent=1 // pred_check
      _
    $region3: #{tpu_custom_call.1} parent=1 // pred_check_branch
      %10 = sbr.rel (0) target = $region5
    $region4: #{tpu_custom_call.1} parent=1 // pred_region
      _
    $region5: #{tpu_custom_call.1} parent=1 // pred_fallthru
      _
    // Predicated region
    $region6: #{tpu_custom_call.1} parent=1 // pred_check
      _
    $region7: #{tpu_custom_call.1} parent=1 // pred_check_branch
      %12 = sbr.rel (0) target = $region9
    $region8: #{tpu_custom_call.1} parent=1 // pred_region
      _
    $region9: #{tpu_custom_call.1} parent=1 // pred_fallthru
      _
    // Predicated region
    $region10: #{tpu_custom_call.1} parent=1 // pred_check
      _
    $region11: #{tpu_custom_call.1} parent=1 // pred_check_branch
      %14 = sbr.rel (0) target = $region13
    $region12: #{tpu_custom_call.1} parent=1 // pred_region
      _
    $region13: #{tpu_custom_call.1} parent=1 // pred_fallthru
      _
    %v15 = vld [vmem:[%s0] sm:$0xff]
    %v16 = vld [vmem:[%s0 + $0x8] sm:$0xff]
    %v17 = vld [vmem:[%s0 + $0x10] sm:$0xff]
    %v18 = vld [vmem:[%s0 + $0x18] sm:$0xff]
    %v19 = vld [vmem:[%s0 + $0x20] sm:$0xff]
    %v20 = vld [vmem:[%s0 + $0x28] sm:$0xff]
    %v21 = vld [vmem:[%s0 + $0x30] sm:$0xff]
    %v22 = vld [vmem:[%s0 + $0x38] sm:$0xff]
    %v23 = vld [vmem:[%s0 + $0x40] sm:$0xff]
    %v24 = vld [vmem:[%s0 + $0x48] sm:$0xff]
    %v25 = vld [vmem:[%s0 + $0x50] sm:$0xff]
    %v26 = vld [vmem:[%s0 + $0x58] sm:$0xff]
    %v27 = vld [vmem:[%s0 + $0x60] sm:$0xff]
    %v28 = vld [vmem:[%s0 + $0x68] sm:$0xff]
    %v29 = vld [vmem:[%s0 + $0x70] sm:$0xff]
    %v30 = vld [vmem:[%s0 + $0x78] sm:$0xff]
    %v31 = vld [vmem:[%s0 + $0x80] sm:$0xff]
    %v32 = vld [vmem:[%s0 + $0x88] sm:$0xff]
    %v33 = vld [vmem:[%s0 + $0x90] sm:$0xff]
    %v34 = vld [vmem:[%s0 + $0x98] sm:$0xff]
    %v35 = vld [vmem:[%s0 + $0xa0] sm:$0xff]
    %v36 = vld [vmem:[%s0 + $0xa8] sm:$0xff]
    %v37 = vld [vmem:[%s0 + $0xb0] sm:$0xff]
    %v38 = vld [vmem:[%s0 + $0xb8] sm:$0xff]
    %v39 = vld [vmem:[%s0 + $0xc0] sm:$0xff]
    %v40 = vld [vmem:[%s0 + $0xc8] sm:$0xff]
    %v41 = vld [vmem:[%s0 + $0xd0] sm:$0xff]
    %v42 = vld [vmem:[%s0 + $0xd8] sm:$0xff]
    %v43 = vld [vmem:[%s0 + $0xe0] sm:$0xff]
    %v44 = vld [vmem:[%s0 + $0xe8] sm:$0xff]
    %v45 = vld [vmem:[%s0 + $0xf0] sm:$0xff]
    %v46 = vld [vmem:[%s0 + $0xf8] sm:$0xff]
    %v47 = vld [vmem:[%s1] sm:$0xff]
    %v48 = vld [vmem:[%s1 + $0x8] sm:$0xff]
    %v49 = vld [vmem:[%s1 + $0x10] sm:$0xff]
    %v50 = vld [vmem:[%s1 + $0x18] sm:$0xff]
    %v51 = vld [vmem:[%s1 + $0x20] sm:$0xff]
    %v52 = vld [vmem:[%s1 + $0x28] sm:$0xff]
    %v53 = vld [vmem:[%s1 + $0x30] sm:$0x3f]
    %v54 = vld [vmem:[%s2] sm:$0x1]
    %v56 = vlaneseq
    %v57 = vshrl.u32 %v56, 7
    %v58 = vsub.s32 0, %v57
    %v59 = vrot.slane %v54, %v58
    %vm61 = vcmask 441344
    %v63 = vsel %vm61, %v15, 0
    %v66 = vsel %vm61, %v16, 0
    %v69 = vsel %vm61, %v17, 0
    %v72 = vsel %vm61, %v18, 0
    %v75 = vsel %vm61, %v19, 0
    %v78 = vsel %vm61, %v20, 0
    %v81 = vsel %vm61, %v21, 0
    %v84 = vsel %vm61, %v22, 0
    %v87 = vsel %vm61, %v23, 0
    %v90 = vsel %vm61, %v24, 0
    %v93 = vsel %vm61, %v25, 0
    %v96 = vsel %vm61, %v26, 0
    %v99 = vsel %vm61, %v27, 0
    %v102 = vsel %vm61, %v28, 0
    %v105 = vsel %vm61, %v29, 0
    %v108 = vsel %vm61, %v30, 0
    %v111 = vsel %vm61, %v31, 0
    %v114 = vsel %vm61, %v32, 0
    %v117 = vsel %vm61, %v33, 0
    %v120 = vsel %vm61, %v34, 0
    %v123 = vsel %vm61, %v35, 0
    %v126 = vsel %vm61, %v36, 0
    %v129 = vsel %vm61, %v37, 0
    %v132 = vsel %vm61, %v38, 0
    %v135 = vsel %vm61, %v39, 0
    %v138 = vsel %vm61, %v40, 0
    %v141 = vsel %vm61, %v41, 0
    %v144 = vsel %vm61, %v42, 0
    %v147 = vsel %vm61, %v43, 0
    %v150 = vsel %vm61, %v44, 0
    %v153 = vsel %vm61, %v45, 0
    %v156 = vsel %vm61, %v46, 0
    %vm158 = vcmask 1045504
    %v160 = vsel %vm158, %v53, 0
    %162 = vmatprep.subr.mxu0 0.0
    %163 = vmatpush1.msra.mxu0 0.0
    %164 = vmatprep.subr.mxu0 0.0
    %165 = vmatpush1.msra.mxu0 0.0
    %166 = vmatprep.subr.mxu0 0.0
    %167 = vmatpush1.msra.mxu0 0.0
    %168 = vmatprep.subr.mxu0 0.0
    %169 = vmatpush1.msra.mxu0 0.0
    %170 = vmatprep.subr.mxu0 0.0
    %171 = vmatpush1.msra.mxu0 0.0
    %172 = vmatprep.subr.mxu0 0.0
    %173 = vmatpush1.msra.mxu0 0.0
    %174 = vmatprep.subr.mxu0 0.0
    %175 = vmatpush1.msra.mxu0 0.0
    %176 = vmatprep.subr.mxu0 0.0
    %177 = vmatpush1.msra.mxu0 0.0
    %178 = vmatprep.subr.mxu0 0.0
    %179 = vmatpush1.msra.mxu0 0.0
    %180 = vmatprep.subr.mxu0 0.0
    %181 = vmatpush1.msra.mxu0 %v160
    %182 = vmatprep.subr.mxu0 0.0
    %183 = vmatpush1.msra.mxu0 %v52
    %184 = vmatprep.subr.mxu0 0.0
    %185 = vmatpush1.msra.mxu0 %v51
    %186 = vmatprep.subr.mxu0 0.0
    %187 = vmatpush1.msra.mxu0 %v50
    %188 = vmatprep.subr.mxu0 0.0
    %189 = vmatpush1.msra.mxu0 %v49
    %190 = vmatprep.subr.mxu0 0.0
    %191 = vmatpush1.msra.mxu0 %v48
    %192 = vmatprep.subr.mxu0 0.0
    %193 = vmatpush1.msra.mxu0 %v47
    %194 = vmatprep.subr.mxu0 0.0
    %195 = vmatpush2.msra.mxu0 0.0
    %196 = vmatprep.subr.mxu0 0.0
    %197 = vmatpush2.msra.mxu0 0.0
    %198 = vmatprep.subr.mxu0 0.0
    %199 = vmatpush2.msra.mxu0 0.0
    %200 = vmatprep.subr.mxu0 0.0
    %201 = vmatpush2.msra.mxu0 0.0
    %202 = vmatprep.subr.mxu0 0.0
    %203 = vmatpush2.msra.mxu0 0.0
    %204 = vmatprep.subr.mxu0 0.0
    %205 = vmatpush2.msra.mxu0 0.0
    %206 = vmatprep.subr.mxu0 0.0
    %207 = vmatpush2.msra.mxu0 0.0
    %208 = vmatprep.subr.mxu0 0.0
    %209 = vmatpush2.msra.mxu0 0.0
    %210 = vmatprep.subr.mxu0 0.0
    %211 = vmatpush2.msra.mxu0 0.0
    %212 = vmatprep.subr.mxu0 0.0
    %213 = vmatpush2.msra.mxu0 0.0
    %214 = vmatprep.subr.mxu0 0.0
    %215 = vmatpush2.msra.mxu0 0.0
    %216 = vmatprep.subr.mxu0 0.0
    %217 = vmatpush2.msra.mxu0 0.0
    %218 = vmatprep.subr.mxu0 0.0
    %219 = vmatpush2.msra.mxu0 0.0
    %220 = vmatprep.subr.mxu0 0.0
    %221 = vmatpush2.msra.mxu0 0.0
    %222 = vmatprep.subr.mxu0 0.0
    %223 = vmatpush2.msra.mxu0 0.0
    %224 = vmatprep.subr.mxu0 0.0
    %225 = vmatpush2.msra.mxu0 0.0
    %226 = vmatprep.mubr.f32.mxu0 0.0
    %227 = vmatmul.mubr.f32.gmra.mxu0 %v63
    %v228 = vpop.f32.mrf.mxu0
    %v229 = vadd.f32 %v59, %v228
    %v230 = vpop.f32.mrf.mxu0
    %231 = vmatprep.mubr.f32.mxu0 0.0
    %232 = vmatmul.mubr.f32.gmra.mxu0 %v66
    %v233 = vpop.f32.mrf.mxu0
    %v234 = vadd.f32 %v59, %v233
    %v235 = vpop.f32.mrf.mxu0
    %236 = vmatprep.mubr.f32.mxu0 0.0
    %237 = vmatmul.mubr.f32.gmra.mxu0 %v69
    %v238 = vpop.f32.mrf.mxu0
    %v239 = vadd.f32 %v59, %v238
    %v240 = vpop.f32.mrf.mxu0
    %241 = vmatprep.mubr.f32.mxu0 0.0
    %242 = vmatmul.mubr.f32.gmra.mxu0 %v72
    %v243 = vpop.f32.mrf.mxu0
    %v244 = vadd.f32 %v59, %v243
    %v245 = vpop.f32.mrf.mxu0
    %246 = vmatprep.mubr.f32.mxu0 0.0
    %247 = vmatmul.mubr.f32.gmra.mxu0 %v75
    %v248 = vpop.f32.mrf.mxu0
    %v249 = vadd.f32 %v59, %v248
    %v250 = vpop.f32.mrf.mxu0
    %251 = vmatprep.mubr.f32.mxu0 0.0
    %252 = vmatmul.mubr.f32.gmra.mxu0 %v78
    %v253 = vpop.f32.mrf.mxu0
    %v254 = vadd.f32 %v59, %v253
    %v255 = vpop.f32.mrf.mxu0
    %256 = vmatprep.mubr.f32.mxu0 0.0
    %257 = vmatmul.mubr.f32.gmra.mxu0 %v81
    %v258 = vpop.f32.mrf.mxu0
    %v259 = vadd.f32 %v59, %v258
    %v260 = vpop.f32.mrf.mxu0
    %261 = vmatprep.mubr.f32.mxu0 0.0
    %262 = vmatmul.mubr.f32.gmra.mxu0 %v84
    %v263 = vpop.f32.mrf.mxu0
    %v264 = vadd.f32 %v59, %v263
    %v265 = vpop.f32.mrf.mxu0
    %266 = vmatprep.mubr.f32.mxu0 0.0
    %267 = vmatmul.mubr.f32.gmra.mxu0 %v87
    %v268 = vpop.f32.mrf.mxu0
    %v269 = vadd.f32 %v59, %v268
    %v270 = vpop.f32.mrf.mxu0
    %271 = vmatprep.mubr.f32.mxu0 0.0
    %272 = vmatmul.mubr.f32.gmra.mxu0 %v90
    %v273 = vpop.f32.mrf.mxu0
    %v274 = vadd.f32 %v59, %v273
    %v275 = vpop.f32.mrf.mxu0
    %276 = vmatprep.mubr.f32.mxu0 0.0
    %277 = vmatmul.mubr.f32.gmra.mxu0 %v93
    %v278 = vpop.f32.mrf.mxu0
    %v279 = vadd.f32 %v59, %v278
    %v280 = vpop.f32.mrf.mxu0
    %281 = vmatprep.mubr.f32.mxu0 0.0
    %282 = vmatmul.mubr.f32.gmra.mxu0 %v96
    %v283 = vpop.f32.mrf.mxu0
    %v284 = vadd.f32 %v59, %v283
    %v285 = vpop.f32.mrf.mxu0
    %286 = vmatprep.mubr.f32.mxu0 0.0
    %287 = vmatmul.mubr.f32.gmra.mxu0 %v99
    %v288 = vpop.f32.mrf.mxu0
    %v289 = vadd.f32 %v59, %v288
    %v290 = vpop.f32.mrf.mxu0
    %291 = vmatprep.mubr.f32.mxu0 0.0
    %292 = vmatmul.mubr.f32.gmra.mxu0 %v102
    %v293 = vpop.f32.mrf.mxu0
    %v294 = vadd.f32 %v59, %v293
    %v295 = vpop.f32.mrf.mxu0
    %296 = vmatprep.mubr.f32.mxu0 0.0
    %297 = vmatmul.mubr.f32.gmra.mxu0 %v105
    %v298 = vpop.f32.mrf.mxu0
    %v299 = vadd.f32 %v59, %v298
    %v300 = vpop.f32.mrf.mxu0
    %301 = vmatprep.mubr.f32.mxu0 0.0
    %302 = vmatmul.mubr.f32.gmra.mxu0 %v108
    %v303 = vpop.f32.mrf.mxu0
    %v304 = vadd.f32 %v59, %v303
    %v305 = vpop.f32.mrf.mxu0
    %306 = vmatprep.mubr.f32.mxu0 0.0
    %307 = vmatmul.mubr.f32.gmra.mxu0 %v111
    %v308 = vpop.f32.mrf.mxu0
    %v309 = vadd.f32 %v59, %v308
    %v310 = vpop.f32.mrf.mxu0
    %311 = vmatprep.mubr.f32.mxu0 0.0
    %312 = vmatmul.mubr.f32.gmra.mxu0 %v114
    %v313 = vpop.f32.mrf.mxu0
    %v314 = vadd.f32 %v59, %v313
    %v315 = vpop.f32.mrf.mxu0
    %316 = vmatprep.mubr.f32.mxu0 0.0
    %317 = vmatmul.mubr.f32.gmra.mxu0 %v117
    %v318 = vpop.f32.mrf.mxu0
    %v319 = vadd.f32 %v59, %v318
    %v320 = vpop.f32.mrf.mxu0
    %321 = vmatprep.mubr.f32.mxu0 0.0
    %322 = vmatmul.mubr.f32.gmra.mxu0 %v120
    %v323 = vpop.f32.mrf.mxu0
    %v324 = vadd.f32 %v59, %v323
    %v325 = vpop.f32.mrf.mxu0
    %326 = vmatprep.mubr.f32.mxu0 0.0
    %327 = vmatmul.mubr.f32.gmra.mxu0 %v123
    %v328 = vpop.f32.mrf.mxu0
    %v329 = vadd.f32 %v59, %v328
    %v330 = vpop.f32.mrf.mxu0
    %331 = vmatprep.mubr.f32.mxu0 0.0
    %332 = vmatmul.mubr.f32.gmra.mxu0 %v126
    %v333 = vpop.f32.mrf.mxu0
    %v334 = vadd.f32 %v59, %v333
    %v335 = vpop.f32.mrf.mxu0
    %336 = vmatprep.mubr.f32.mxu0 0.0
    %337 = vmatmul.mubr.f32.gmra.mxu0 %v129
    %v338 = vpop.f32.mrf.mxu0
    %v339 = vadd.f32 %v59, %v338
    %v340 = vpop.f32.mrf.mxu0
    %341 = vmatprep.mubr.f32.mxu0 0.0
    %342 = vmatmul.mubr.f32.gmra.mxu0 %v132
    %v343 = vpop.f32.mrf.mxu0
    %v344 = vadd.f32 %v59, %v343
    %v345 = vpop.f32.mrf.mxu0
    %346 = vmatprep.mubr.f32.mxu0 0.0
    %347 = vmatmul.mubr.f32.gmra.mxu0 %v135
    %v348 = vpop.f32.mrf.mxu0
    %v349 = vadd.f32 %v59, %v348
    %v350 = vpop.f32.mrf.mxu0
    %351 = vmatprep.mubr.f32.mxu0 0.0
    %352 = vmatmul.mubr.f32.gmra.mxu0 %v138
    %v353 = vpop.f32.mrf.mxu0
    %v354 = vadd.f32 %v59, %v353
    %v355 = vpop.f32.mrf.mxu0
    %356 = vmatprep.mubr.f32.mxu0 0.0
    %357 = vmatmul.mubr.f32.gmra.mxu0 %v141
    %v358 = vpop.f32.mrf.mxu0
    %v359 = vadd.f32 %v59, %v358
    %v360 = vpop.f32.mrf.mxu0
    %361 = vmatprep.mubr.f32.mxu0 0.0
    %362 = vmatmul.mubr.f32.gmra.mxu0 %v144
    %v363 = vpop.f32.mrf.mxu0
    %v364 = vadd.f32 %v59, %v363
    %v365 = vpop.f32.mrf.mxu0
    %366 = vmatprep.mubr.f32.mxu0 0.0
    %367 = vmatmul.mubr.f32.gmra.mxu0 %v147
    %v368 = vpop.f32.mrf.mxu0
    %v369 = vadd.f32 %v59, %v368
    %v370 = vpop.f32.mrf.mxu0
    %371 = vmatprep.mubr.f32.mxu0 0.0
    %372 = vmatmul.mubr.f32.gmra.mxu0 %v150
    %v373 = vpop.f32.mrf.mxu0
    %v374 = vadd.f32 %v59, %v373
    %v375 = vpop.f32.mrf.mxu0
    %376 = vmatprep.mubr.f32.mxu0 0.0
    %377 = vmatmul.mubr.f32.gmra.mxu0 %v153
    %v378 = vpop.f32.mrf.mxu0
    %v379 = vadd.f32 %v59, %v378
    %v380 = vpop.f32.mrf.mxu0
    %381 = vmatprep.mubr.f32.mxu0 0.0
    %382 = vmatmul.mubr.f32.gmra.mxu0 %v156
    %v383 = vpop.f32.mrf.mxu0
    %v384 = vadd.f32 %v59, %v383
    %v385 = vpop.f32.mrf.mxu0
    %386 = vdwg.mxu0
    %v387 = vmax.f32 %v229, 0.0
    %v388 = vmax.f32 %v234, 0.0
    %v389 = vmax.f32 %v239, 0.0
    %v390 = vmax.f32 %v244, 0.0
    %v391 = vmax.f32 %v249, 0.0
    %v392 = vmax.f32 %v254, 0.0
    %v393 = vmax.f32 %v259, 0.0
    %v394 = vmax.f32 %v264, 0.0
    %v395 = vmax.f32 %v269, 0.0
    %v396 = vmax.f32 %v274, 0.0
    %v397 = vmax.f32 %v279, 0.0
    %v398 = vmax.f32 %v284, 0.0
    %v399 = vmax.f32 %v289, 0.0
    %v400 = vmax.f32 %v294, 0.0
    %v401 = vmax.f32 %v299, 0.0
    %v402 = vmax.f32 %v304, 0.0
    %v403 = vmax.f32 %v309, 0.0
    %v404 = vmax.f32 %v314, 0.0
    %v405 = vmax.f32 %v319, 0.0
    %v406 = vmax.f32 %v324, 0.0
    %v407 = vmax.f32 %v329, 0.0
    %v408 = vmax.f32 %v334, 0.0
    %v409 = vmax.f32 %v339, 0.0
    %v410 = vmax.f32 %v344, 0.0
    %v411 = vmax.f32 %v349, 0.0
    %v412 = vmax.f32 %v354, 0.0
    %v413 = vmax.f32 %v359, 0.0
    %v414 = vmax.f32 %v364, 0.0
    %v415 = vmax.f32 %v369, 0.0
    %v416 = vmax.f32 %v374, 0.0
    %v417 = vmax.f32 %v379, 0.0
    %v418 = vmax.f32 %v384, 0.0
    %419 = vst [vmem:[#allocation2] sm:$0xff] %v387
    %420 = vst [vmem:[#allocation2 + $0x8] sm:$0xff] %v388
    %421 = vst [vmem:[#allocation2 + $0x10] sm:$0xff] %v389
    %422 = vst [vmem:[#allocation2 + $0x18] sm:$0xff] %v390
    %423 = vst [vmem:[#allocation2 + $0x20] sm:$0xff] %v391
    %424 = vst [vmem:[#allocation2 + $0x28] sm:$0xff] %v392
    %425 = vst [vmem:[#allocation2 + $0x30] sm:$0xff] %v393
    %426 = vst [vmem:[#allocation2 + $0x38] sm:$0xff] %v394
    %427 = vst [vmem:[#allocation2 + $0x40] sm:$0xff] %v395
    %428 = vst [vmem:[#allocation2 + $0x48] sm:$0xff] %v396
    %429 = vst [vmem:[#allocation2 + $0x50] sm:$0xff] %v397
    %430 = vst [vmem:[#allocation2 + $0x58] sm:$0xff] %v398
    %431 = vst [vmem:[#allocation2 + $0x60] sm:$0xff] %v399
    %432 = vst [vmem:[#allocation2 + $0x68] sm:$0xff] %v400
    %433 = vst [vmem:[#allocation2 + $0x70] sm:$0xff] %v401
    %434 = vst [vmem:[#allocation2 + $0x78] sm:$0xff] %v402
    %435 = vst [vmem:[#allocation2 + $0x80] sm:$0xff] %v403
    %436 = vst [vmem:[#allocation2 + $0x88] sm:$0xff] %v404
    %437 = vst [vmem:[#allocation2 + $0x90] sm:$0xff] %v405
    %438 = vst [vmem:[#allocation2 + $0x98] sm:$0xff] %v406
    %439 = vst [vmem:[#allocation2 + $0xa0] sm:$0xff] %v407
    %440 = vst [vmem:[#allocation2 + $0xa8] sm:$0xff] %v408
    %441 = vst [vmem:[#allocation2 + $0xb0] sm:$0xff] %v409
    %442 = vst [vmem:[#allocation2 + $0xb8] sm:$0xff] %v410
    %443 = vst [vmem:[#allocation2 + $0xc0] sm:$0xff] %v411
    %444 = vst [vmem:[#allocation2 + $0xc8] sm:$0xff] %v412
    %445 = vst [vmem:[#allocation2 + $0xd0] sm:$0xff] %v413
    %446 = vst [vmem:[#allocation2 + $0xd8] sm:$0xff] %v414
    %447 = vst [vmem:[#allocation2 + $0xe0] sm:$0xff] %v415
    %448 = vst [vmem:[#allocation2 + $0xe8] sm:$0xff] %v416
    %449 = vst [vmem:[#allocation2 + $0xf0] sm:$0xff] %v417
    %450 = vst [vmem:[#allocation2 + $0xf8] sm:$0xff] %v418
    // Predicated region
    $region14: #{tpu_custom_call.1} parent=1 // pred_check
      _
    $region15: #{tpu_custom_call.1} parent=1 // pred_check_branch
      %452 = sbr.rel (0) target = $region17
    $region16: #{tpu_custom_call.1} parent=1 // pred_region
      %s454 = ssub.s32 4096, 4096
      %455 = vsyncadd [#allocation3], %s454
      %s456 = sshll.u32 [#allocation2], 4
      %s457 = int_to_ptr.vmem [resolvable:$true] %s456
      %462 = dma.vmem_to_hbm [thread:$0]  %s457, 4096, %s3, [#allocation3], 128, 128, 8
    $region17: #{tpu_custom_call.1} parent=1 // pred_fallthru
      _
    // Predicated region
    $region18: #{tpu_custom_call.1} parent=1 // pred_check
      _
    $region19: #{tpu_custom_call.1} parent=1 // pred_check_branch
      %464 = sbr.rel (0) target = $region21
    $region20: #{tpu_custom_call.1} parent=1 // pred_region
      %465 = dma.done [#allocation3], 4096
    $region21: #{tpu_custom_call.1} parent=1 // pred_fallthru
      _
    %466 = vsyncpa [#allocation3], 1

</llo_original>
